<compile_context>
chip_gen: v7x
topology: tpu7x:2x2x1
jax: 0.10.0
libtpu: 0.0.40
codegen_flags: <defaults>
</compile_context>

<pallas_src>
import functools

import jax
import jax.numpy as jnp
from jax.experimental import pallas as pl
from jax.experimental.pallas import tpu as pltpu

KH = KW = 4
HW = KH * KW
EPS = 1e-5
LANE = 128


def _round_up(n, m):
    return (n + m - 1) // m * m


def _init_layer_kernel(x_ref, w_ref, gt_ref, gb_ref, s_ref, o_ref,
                       stats_scr, chan_scr, *, count, half):
    # x_ref:  (B, nz)      VMEM  noise
    # w_ref:  (nz, Dp)     VMEM  UN-normalized, padded-flattened conv-T weight
    # gt_ref: (2C, Dp)     VMEM  0/1 grouping: row c marks channel c's HW cols
    # gb_ref: (2, 2C)      VMEM  row 0 = BN gamma, row 1 = BN beta
    # s_ref:  (1, 1)       SMEM  inv_sigma = 1 / spectral_norm(W)
    # o_ref:  (B, half)    VMEM  half = round_up(C*HW, 128)  (lane-dense store)
    # stats_scr: (2, Dp) f32 scratch, chan_scr: (2, 2C) f32 scratch
    inv_sigma = s_ref[0, 0]

    # ConvTranspose2d(nz, 2C, k=4, s=1, p=0) on a 1x1 spatial input is exactly
    # one matmul: y_raw[b, oc*HW + hw] = sum_ic x[b, ic] * W[ic, oc, h, w].
    y = jnp.dot(x_ref[...], w_ref[...],
                preferred_element_type=jnp.float32)                    # (B, Dp)

    # Batch sums for the BN statistics, written as scratch rows (no sublane
    # concat relayout), then one lane-axis contraction against Gt gives the
    # per-channel totals over (B, HW).
    stats_scr[0:1, :] = jnp.sum(y, axis=0, keepdims=True)
    stats_scr[1:2, :] = jnp.sum(y * y, axis=0, keepdims=True)
    ch = jax.lax.dot_general(
        stats_scr[...], gt_ref[...],
        dimension_numbers=(((1,), (1,)), ((), ())),
        preferred_element_type=jnp.float32)                            # (2, 2C)

    # Fold 1/sigma exactly into the training-mode BN affine so y never has to
    # be normalized:  y = inv_sigma * y_raw  =>
    #   mean   = inv_sigma   * E[y_raw]
    #   E[y^2] = inv_sigma^2 * E[y_raw^2]
    #   out    = (scale * inv_sigma) * y_raw + (beta - mean * scale)
    inv_count = 1.0 / count
    mean_c = ch[0:1] * (inv_sigma * inv_count)                         # (1, 2C)
    e2_c = ch[1:2] * (inv_sigma * inv_sigma * inv_count)
    var_c = jnp.maximum(e2_c - mean_c * mean_c, 0.0)
    scale_c = gb_ref[0:1] * jax.lax.rsqrt(var_c + EPS)                 # gamma / std
    chan_scr[0:1, :] = scale_c * inv_sigma                             # acts on y_raw
    chan_scr[1:2, :] = gb_ref[1:2] - mean_c * scale_c                  # beta - mean*scale

    # Broadcast the per-channel affine back to columns with one small matmul,
    # then the whole BN is a single FMA pass over the raw (B, Dp) tile.
    aff = jnp.dot(chan_scr[...], gt_ref[...],
                  preferred_element_type=jnp.float32)                  # (2, Dp)
    yn = y * aff[0:1] + aff[1:2]

    # GLU over channels.  Both halves are vreg-aligned static slices
    # (half % 128 == 0) — no roll / cross-lane realignment needed.
    o_ref[...] = (yn[:, :half] * jax.nn.sigmoid(yn[:, half:])).astype(o_ref.dtype)


def make_init_layer_params(w, gamma, beta):
    """One-time parameter setup (hoisted out of the forward pass).

    Builds the permanently pre-flattened, lane-dense padded weight (nz, Dp),
    the 0/1 channel-grouping matrix, the gamma/beta tile, and the (2C, nz*HW)
    matricization used by the spectral-norm power iteration.
    """
    nz, two_c = w.shape[0], w.shape[1]
    C = two_c // 2
    half = _round_up(C * HW, LANE)
    w = w.astype(jnp.float32)

    # (nz, 2C, H, W) -> channel-major flat, each GLU half padded to `half`
    # columns: [ch 0..C-1 | zeros | ch C..2C-1 | zeros].
    w_flat = w.reshape(nz, two_c, HW)
    zpad = jnp.zeros((nz, half - C * HW), jnp.float32)
    w2d = jnp.concatenate(
        [w_flat[:, :C].reshape(nz, C * HW), zpad,
         w_flat[:, C:].reshape(nz, C * HW), zpad], axis=1)            # (nz, 2*half)

    # Column -> channel map for the padded layout (-1 = padding column).
    col = jnp.arange(2 * half)
    in_first = col < C * HW
    in_gate = (col >= half) & (col < half + C * HW)
    ch_of_col = jnp.where(in_first, col // HW,
                          jnp.where(in_gate, C + (col - half) // HW, -1))
    gt = (jnp.arange(two_c)[:, None] == ch_of_col[None, :]).astype(jnp.float32)

    gb = jnp.stack([gamma.astype(jnp.float32),
                    beta.astype(jnp.float32)], axis=0)                # (2, 2C)

    # PyTorch spectral_norm uses dim=1 for ConvTranspose2d -> (2C, nz*HW).
    w_mat = jnp.transpose(w, (1, 0, 2, 3)).reshape(two_c, -1)

    return dict(w2d=w2d, gt=gt, gb=gb, w_mat=w_mat, C=C, half=half)


def _power_step(w_mat, u):
    """One PyTorch-style spectral_norm power-iteration step -> (sigma, u_new)."""
    v = w_mat.T @ u
    v = v / (jnp.linalg.norm(v) + 1e-12)
    u_new = w_mat @ v
    u_new = u_new / (jnp.linalg.norm(u_new) + 1e-12)
    sigma = u_new @ (w_mat @ v)
    return sigma, u_new


@functools.partial(jax.jit, static_argnames=("C", "half"))
def init_layer_forward(noise, w2d, gt, gb, w_mat, u, *, C, half):
    """noise: (B, nz) or (B, nz, 1, 1).  Returns (out (B, C, 4, 4), u_new)."""
    B = noise.shape[0]
    x = noise.reshape(B, -1).astype(jnp.float32)      # == noise.view(B, -1, 1, 1)
    two_c = gt.shape[0]
    Dp = 2 * half

    # sigma only; 1/sigma is folded into BN inside the kernel (no w/sigma copy).
    sigma, u_new = _power_step(w_mat, u)
    inv_sigma = (1.0 / sigma).reshape(1, 1).astype(jnp.float32)

    kernel = functools.partial(_init_layer_kernel,
                               count=float(B * HW), half=half)
    out_pad = pl.pallas_call(
        kernel,
        out_shape=jax.ShapeDtypeStruct((B, half), jnp.float32),
        in_specs=[pl.BlockSpec(memory_space=pltpu.MemorySpace.VMEM)] * 4
                 + [pl.BlockSpec(memory_space=pltpu.MemorySpace.SMEM)],
        out_specs=pl.BlockSpec(memory_space=pltpu.MemorySpace.VMEM),
        scratch_shapes=[pltpu.VMEM((2, Dp), jnp.float32),
                        pltpu.VMEM((2, two_c), jnp.float32)],
    )(x, w2d, gt, gb, inv_sigma)

    out = out_pad[:, :C * HW].reshape(B, C, KH, KW)
    return out, u_new


def _reference(noise, w, u, gamma, beta):
    """Pure-JAX reference of the PyTorch forward (training-mode BN)."""
    two_c = w.shape[1]
    sigma, _ = _power_step(jnp.transpose(w, (1, 0, 2, 3)).reshape(two_c, -1), u)
    w_sn = w / sigma
    x = noise.reshape(noise.shape[0], -1).astype(jnp.float32)
    y = jnp.einsum('bi,iohw->bohw', x, w_sn)
    mean = y.mean(axis=(0, 2, 3), keepdims=True)
    var = jnp.mean((y - mean) ** 2, axis=(0, 2, 3), keepdims=True)
    yn = (y - mean) * jax.lax.rsqrt(var + EPS)
    yn = yn * gamma.reshape(1, -1, 1, 1) + beta.reshape(1, -1, 1, 1)
    C = yn.shape[1] // 2
    return yn[:, :C] * jax.nn.sigmoid(yn[:, C:])


if __name__ == "__main__":
    B, nz, channel = 2, 32, 4
    two_c = channel * 2

    key = jax.random.PRNGKey(0)
    k_noise, k_w, k_u = jax.random.split(key, 3)

    noise = jax.random.normal(k_noise, (B, nz), dtype=jnp.float32)

    # ConvTranspose2d weight (in_channels, out_channels, kH, kW); bias=False.
    bound = 1.0 / float(jnp.sqrt(two_c * KH * KW))
    w = jax.random.uniform(k_w, (nz, two_c, KH, KW),
                           minval=-bound, maxval=bound, dtype=jnp.float32)

    # Persistent power-iteration vector (PyTorch spectral_norm `u` buffer).
    u0 = jax.random.normal(k_u, (two_c,), dtype=jnp.float32)
    u0 = u0 / (jnp.linalg.norm(u0) + 1e-12)

    # BatchNorm2d params at module init: weight=1, bias=0.
    gamma = jnp.ones((two_c,), jnp.float32)
    beta = jnp.zeros((two_c,), jnp.float32)

    # TODO(synk): BatchNorm2d training mode also updates running_mean/var
    # buffers; the kernel reproduces the forward output only.
    params = make_init_layer_params(w, gamma, beta)
    out, u_new = init_layer_forward(noise, params["w2d"], params["gt"],
                                    params["gb"], params["w_mat"], u0,
                                    C=params["C"], half=params["half"])
    out = jax.block_until_ready(out)

    ref = _reference(noise, w, u0, gamma, beta)
    assert out.shape == (B, channel, KH, KW), out.shape
    assert jnp.allclose(out, ref, atol=1e-4, rtol=1e-4), \
        float(jnp.max(jnp.abs(out - ref)))

    print("KERNEL_OK")
</pallas_src>

<mosaic_0001>
module attributes {stable_mosaic.version = 11 : i64} {
  func.func @_init_layer_kernel(%arg0: memref<2x32xf32, #tpu.memory_space<vmem>>, %arg1: memref<32x256xf32, #tpu.memory_space<vmem>>, %arg2: memref<8x256xf32, #tpu.memory_space<vmem>>, %arg3: memref<2x8xf32, #tpu.memory_space<vmem>>, %arg4: memref<1x1xf32, #tpu.memory_space<smem>>, %arg5: memref<2x128xf32, #tpu.memory_space<vmem>>, %arg6: memref<2x256xf32, #tpu.memory_space<vmem>>, %arg7: memref<2x8xf32, #tpu.memory_space<vmem>>) attributes {dimension_semantics = [], scalar_prefetch = 0 : i64, scratch_operands = 2 : i64, tpu.core_type = #tpu.core_type<tc>} {
    %c0 = arith.constant 0 : index
    %c0_0 = arith.constant 0 : index
    %0 = memref.load %arg4[%c0, %c0_0] : memref<1x1xf32, #tpu.memory_space<smem>>
    %c0_1 = arith.constant 0 : index
    %c0_2 = arith.constant 0 : index
    %1 = vector.load %arg0[%c0_1, %c0_2] : memref<2x32xf32, #tpu.memory_space<vmem>>, vector<2x32xf32>
    %c0_3 = arith.constant 0 : index
    %c0_4 = arith.constant 0 : index
    %2 = vector.load %arg1[%c0_3, %c0_4] : memref<32x256xf32, #tpu.memory_space<vmem>>, vector<32x256xf32>
    %cst = arith.constant dense<0.000000e+00> : vector<2x256xf32>
    %3 = tpu.matmul %1, %2, %cst {dimension_numbers = #tpu.dot_dimension_numbers<[1], [0], [0], [1], [0, 0, 1, 1], [], []>} : vector<2x32xf32>, vector<32x256xf32>, vector<2x256xf32> -> vector<2x256xf32>
    %cst_5 = arith.constant dense<0.000000e+00> : vector<256xf32>
    %4 = vector.multi_reduction <add>, %3, %cst_5 [0] : vector<2x256xf32> to vector<256xf32>
    %5 = vector.shape_cast %4 : vector<256xf32> to vector<1x256xf32>
    %c0_6 = arith.constant 0 : index
    %c0_7 = arith.constant 0 : index
    %6 = vector.load %arg6[%c0_6, %c0_7] : memref<2x256xf32, #tpu.memory_space<vmem>>, vector<1x256xf32>
    tpu.vector_store %arg6[%c0_6, %c0_7], %5 {strides = array<i32>} : memref<2x256xf32, #tpu.memory_space<vmem>>, vector<1x256xf32>,
    %7 = arith.mulf %3, %3 : vector<2x256xf32>
    %cst_8 = arith.constant dense<0.000000e+00> : vector<256xf32>
    %8 = vector.multi_reduction <add>, %7, %cst_8 [0] : vector<2x256xf32> to vector<256xf32>
    %9 = vector.shape_cast %8 : vector<256xf32> to vector<1x256xf32>
    %c1 = arith.constant 1 : index
    %c0_9 = arith.constant 0 : index
    %10 = vector.load %arg6[%c1, %c0_9] : memref<2x256xf32, #tpu.memory_space<vmem>>, vector<1x256xf32>
    tpu.vector_store %arg6[%c1, %c0_9], %9 {strides = array<i32>} : memref<2x256xf32, #tpu.memory_space<vmem>>, vector<1x256xf32>,
    %c0_10 = arith.constant 0 : index
    %c0_11 = arith.constant 0 : index
    %11 = vector.load %arg6[%c0_10, %c0_11] : memref<2x256xf32, #tpu.memory_space<vmem>>, vector<2x256xf32>
    %c0_12 = arith.constant 0 : index
    %c0_13 = arith.constant 0 : index
    %12 = vector.load %arg2[%c0_12, %c0_13] : memref<8x256xf32, #tpu.memory_space<vmem>>, vector<8x256xf32>
    %cst_14 = arith.constant dense<0.000000e+00> : vector<2x8xf32>
    %13 = tpu.matmul %11, %12, %cst_14 {dimension_numbers = #tpu.dot_dimension_numbers<[1], [1], [0], [0], [0, 0, 1, 0], [], []>} : vector<2x256xf32>, vector<8x256xf32>, vector<2x8xf32> -> vector<2x8xf32>
    %14 = vector.extract_strided_slice %13 {offsets = [0, 0], sizes = [1, 8], strides = [1, 1]} : vector<2x8xf32> to vector<1x8xf32>
    %cst_15 = arith.constant 3.125000e-02 : f32
    %15 = arith.mulf %0, %cst_15 : f32
    %16 = vector.broadcast %15 : f32 to vector<1x8xf32>
    %17 = arith.mulf %14, %16 : vector<1x8xf32>
    %18 = vector.extract_strided_slice %13 {offsets = [1, 0], sizes = [1, 8], strides = [1, 1]} : vector<2x8xf32> to vector<1x8xf32>
    %19 = arith.mulf %0, %0 : f32
    %cst_16 = arith.constant 3.125000e-02 : f32
    %20 = arith.mulf %19, %cst_16 : f32
    %21 = vector.broadcast %20 : f32 to vector<1x8xf32>
    %22 = arith.mulf %18, %21 : vector<1x8xf32>
    %23 = arith.mulf %17, %17 : vector<1x8xf32>
    %24 = arith.subf %22, %23 : vector<1x8xf32>
    %cst_17 = arith.constant 0.000000e+00 : f32
    %25 = vector.broadcast %cst_17 : f32 to vector<1x8xf32>
    %26 = arith.maximumf %24, %25 : vector<1x8xf32>
    %c0_18 = arith.constant 0 : index
    %c0_19 = arith.constant 0 : index
    %27 = vector.load %arg3[%c0_18, %c0_19] : memref<2x8xf32, #tpu.memory_space<vmem>>, vector<1x8xf32>
    %cst_20 = arith.constant 9.99999974E-6 : f32
    %28 = vector.broadcast %cst_20 : f32 to vector<1x8xf32>
    %29 = arith.addf %26, %28 : vector<1x8xf32>
    %30 = math.rsqrt %29 : vector<1x8xf32>
    %31 = arith.mulf %27, %30 : vector<1x8xf32>
    %32 = vector.broadcast %0 : f32 to vector<1x8xf32>
    %33 = arith.mulf %31, %32 : vector<1x8xf32>
    %c0_21 = arith.constant 0 : index
    %c0_22 = arith.constant 0 : index
    %34 = vector.load %arg7[%c0_21, %c0_22] : memref<2x8xf32, #tpu.memory_space<vmem>>, vector<1x8xf32>
    tpu.vector_store %arg7[%c0_21, %c0_22], %33 {strides = array<i32>} : memref<2x8xf32, #tpu.memory_space<vmem>>, vector<1x8xf32>,
    %c1_23 = arith.constant 1 : index
    %c0_24 = arith.constant 0 : index
    %35 = vector.load %arg3[%c1_23, %c0_24] : memref<2x8xf32, #tpu.memory_space<vmem>>, vector<1x8xf32>
    %36 = arith.mulf %17, %31 : vector<1x8xf32>
    %37 = arith.subf %35, %36 : vector<1x8xf32>
    %c1_25 = arith.constant 1 : index
    %c0_26 = arith.constant 0 : index
    %38 = vector.load %arg7[%c1_25, %c0_26] : memref<2x8xf32, #tpu.memory_space<vmem>>, vector<1x8xf32>
    tpu.vector_store %arg7[%c1_25, %c0_26], %37 {strides = array<i32>} : memref<2x8xf32, #tpu.memory_space<vmem>>, vector<1x8xf32>,
    %c0_27 = arith.constant 0 : index
    %c0_28 = arith.constant 0 : index
    %39 = vector.load %arg7[%c0_27, %c0_28] : memref<2x8xf32, #tpu.memory_space<vmem>>, vector<2x8xf32>
    %c0_29 = arith.constant 0 : index
    %c0_30 = arith.constant 0 : index
    %40 = vector.load %arg2[%c0_29, %c0_30] : memref<8x256xf32, #tpu.memory_space<vmem>>, vector<8x256xf32>
    %cst_31 = arith.constant dense<0.000000e+00> : vector<2x256xf32>
    %41 = tpu.matmul %39, %40, %cst_31 {dimension_numbers = #tpu.dot_dimension_numbers<[1], [0], [0], [1], [0, 0, 1, 1], [], []>} : vector<2x8xf32>, vector<8x256xf32>, vector<2x256xf32> -> vector<2x256xf32>
    %42 = vector.extract_strided_slice %41 {offsets = [0, 0], sizes = [1, 256], strides = [1, 1]} : vector<2x256xf32> to vector<1x256xf32>
    %43 = vector.broadcast %42 : vector<1x256xf32> to vector<2x256xf32>
    %44 = arith.mulf %3, %43 : vector<2x256xf32>
    %45 = vector.extract_strided_slice %41 {offsets = [1, 0], sizes = [1, 256], strides = [1, 1]} : vector<2x256xf32> to vector<1x256xf32>
    %46 = vector.broadcast %45 : vector<1x256xf32> to vector<2x256xf32>
    %47 = arith.addf %44, %46 : vector<2x256xf32>
    %48 = vector.extract_strided_slice %47 {offsets = [0, 0], sizes = [2, 128], strides = [1, 1]} : vector<2x256xf32> to vector<2x128xf32>
    %49 = vector.extract_strided_slice %47 {offsets = [0, 128], sizes = [2, 128], strides = [1, 1]} : vector<2x256xf32> to vector<2x128xf32>
    %50 = arith.negf %49 : vector<2x128xf32>
    %51 = math.exp %50 : vector<2x128xf32>
    %cst_32 = arith.constant 1.000000e+00 : f32
    %52 = vector.broadcast %cst_32 : f32 to vector<2x128xf32>
    %53 = arith.addf %52, %51 : vector<2x128xf32>
    %54 = arith.divf %52, %53 : vector<2x128xf32>
    %55 = arith.mulf %48, %54 : vector<2x128xf32>
    %c0_33 = arith.constant 0 : index
    %c0_34 = arith.constant 0 : index
    %56 = vector.load %arg5[%c0_33, %c0_34] : memref<2x128xf32, #tpu.memory_space<vmem>>, vector<2x128xf32>
    tpu.vector_store %arg5[%c0_33, %c0_34], %55 {strides = array<i32>} : memref<2x128xf32, #tpu.memory_space<vmem>>, vector<2x128xf32>,
    return
  }
}

</mosaic_0001>

<llo_original>
// kernel: init_layer_forward.1
$region0: #{init_layer_forward.1}
  #allocation0 [shape = 'u32[]', space=smem, size = 0x4, offset = 0x4, fixed_abs, tag = 'smem constant byte address 0x4 - core index']
  #allocation1 [shape = 'u32[144,128]{1,0:T(1,128)}', space=vmem, size = 0x12000, scoped, tag = 'internal scratch']
  #allocation2 [shape = 'f32[2,256]{1,0:T(2,128)}', space=vmem, size = 0x800, scoped, tag = 'scratch operand']
  #allocation3 [shape = 'f32[2,8]{1,0:T(2,128)}', space=vmem, size = 0x400, scoped, tag = 'scratch operand']
  #allocation4 [shape = 'f32[1,1]{1,0:T(1,128)S(6)}', space=smem, size = 0x200, scoped, tag = 'scoped memory for init_layer_forward.1']
  %s0 = inlined_call_operand.vmem [shape: f32[2,32], index: 0, kind: input, shape index: {}]
  %s1 = inlined_call_operand.vmem [shape: f32[32,256], index: 1, kind: input, shape index: {}]
  %s2 = inlined_call_operand.vmem [shape: f32[8,256], index: 2, kind: input, shape index: {}]
  %s3 = inlined_call_operand.vmem [shape: f32[2,8], index: 3, kind: input, shape index: {}]
  %s4 = inlined_call_operand.<no memory space> [shape: f32[1,1], index: 4, kind: input, shape index: {}]
  %s5 = inlined_call_operand.vmem [shape: f32[2,128], index: 5, kind: output, shape index: {}]
  %s6 = sld [smem:[#allocation0]]
  $region30: #{init_layer_forward.1} parent=0
    _
  %s8 = ssub.s32 1, %s6
  %s9 = scalar_select 0, %s8, %s6
  %10 = sst [smem:[#allocation4]] %s4
  // Predicated region
  $region2: #{init_layer_forward.1} parent=0 // pred_check
    _
  $region3: #{init_layer_forward.1} parent=0 // pred_check_branch
    %12 = sbr.rel (0) target = $region5
  $region4: #{init_layer_forward.1} parent=0 // pred_region
    _
  $region5: #{init_layer_forward.1} parent=0 // pred_fallthru
    _
  // Predicated region
  $region6: #{init_layer_forward.1} parent=0 // pred_check
    _
  $region7: #{init_layer_forward.1} parent=0 // pred_check_branch
    %14 = sbr.rel (0) target = $region9
  $region8: #{init_layer_forward.1} parent=0 // pred_region
    _
  $region9: #{init_layer_forward.1} parent=0 // pred_fallthru
    _
  // Predicated region
  $region10: #{init_layer_forward.1} parent=0 // pred_check
    _
  $region11: #{init_layer_forward.1} parent=0 // pred_check_branch
    %16 = sbr.rel (0) target = $region13
  $region12: #{init_layer_forward.1} parent=0 // pred_region
    _
  $region13: #{init_layer_forward.1} parent=0 // pred_fallthru
    _
  // Predicated region
  $region14: #{init_layer_forward.1} parent=0 // pred_check
    _
  $region15: #{init_layer_forward.1} parent=0 // pred_check_branch
    %18 = sbr.rel (0) target = $region17
  $region16: #{init_layer_forward.1} parent=0 // pred_region
    _
  $region17: #{init_layer_forward.1} parent=0 // pred_fallthru
    _
  // Predicated region
  $region18: #{init_layer_forward.1} parent=0 // pred_check
    _
  $region19: #{init_layer_forward.1} parent=0 // pred_check_branch
    %20 = sbr.rel (0) target = $region21
  $region20: #{init_layer_forward.1} parent=0 // pred_region
    _
  $region21: #{init_layer_forward.1} parent=0 // pred_fallthru
    _
  %s21 = sld [smem:[#allocation4]]
  %v22 = vld [vmem:[%s0] sm:$0x3]
  %v23 = vld [vmem:[%s1] sm:$0xff]
  %v24 = vld [vmem:[%s1 + $0x8] sm:$0xff]
  %v25 = vld [vmem:[%s1 + $0x10] sm:$0xff]
  %v26 = vld [vmem:[%s1 + $0x18] sm:$0xff]
  %v27 = vld [vmem:[%s1 + $0x20] sm:$0xff]
  %v28 = vld [vmem:[%s1 + $0x28] sm:$0xff]
  %v29 = vld [vmem:[%s1 + $0x30] sm:$0xff]
  %v30 = vld [vmem:[%s1 + $0x38] sm:$0xff]
  %vm31 = vcmask 261120
  %v33 = vsel %vm31, %v22, 0
  %35 = vmatprep.subr.mxu0 %v24
  %36 = vmatpush1.msra.mxu0 %v23
  %37 = vmatprep.subr.mxu0 %v26
  %38 = vmatpush1.msra.mxu0 %v25
  %39 = vmatprep.subr.mxu0 %v28
  %40 = vmatpush1.msra.mxu0 %v27
  %41 = vmatprep.subr.mxu0 %v30
  %42 = vmatpush1.msra.mxu0 %v29
  %43 = vmatprep.subr.mxu0 0.0
  %44 = vmatpush1.msra.mxu0 0.0
  %45 = vmatprep.subr.mxu0 0.0
  %46 = vmatpush1.msra.mxu0 0.0
  %47 = vmatprep.subr.mxu0 0.0
  %48 = vmatpush1.msra.mxu0 0.0
  %49 = vmatprep.subr.mxu0 0.0
  %50 = vmatpush1.msra.mxu0 0.0
  %51 = vmatprep.subr.mxu0 0.0
  %52 = vmatpush1.msra.mxu0 0.0
  %53 = vmatprep.subr.mxu0 0.0
  %54 = vmatpush1.msra.mxu0 0.0
  %55 = vmatprep.subr.mxu0 0.0
  %56 = vmatpush1.msra.mxu0 0.0
  %57 = vmatprep.subr.mxu0 0.0
  %58 = vmatpush1.msra.mxu0 0.0
  %59 = vmatprep.subr.mxu0 0.0
  %60 = vmatpush1.msra.mxu0 0.0
  %61 = vmatprep.subr.mxu0 0.0
  %62 = vmatpush1.msra.mxu0 0.0
  %63 = vmatprep.subr.mxu0 0.0
  %64 = vmatpush1.msra.mxu0 0.0
  %65 = vmatprep.subr.mxu0 0.0
  %66 = vmatpush1.msra.mxu0 0.0
  %67 = vmatprep.subr.mxu0 0.0
  %68 = vmatpush1.msra.mxu0 0.0
  %69 = vmatprep.subr.mxu0 0.0
  %70 = vmatpush1.msra.mxu0 0.0
  %71 = vmatprep.subr.mxu0 0.0
  %72 = vmatpush1.msra.mxu0 0.0
  %73 = vmatprep.subr.mxu0 0.0
  %74 = vmatpush1.msra.mxu0 0.0
  %75 = vmatprep.subr.mxu0 0.0
  %76 = vmatpush1.msra.mxu0 0.0
  %77 = vmatprep.subr.mxu0 0.0
  %78 = vmatpush1.msra.mxu0 0.0
  %79 = vmatprep.subr.mxu0 0.0
  %80 = vmatpush1.msra.mxu0 0.0
  %81 = vmatprep.subr.mxu0 0.0
  %82 = vmatpush1.msra.mxu0 0.0
  %83 = vmatprep.subr.mxu0 0.0
  %84 = vmatpush1.msra.mxu0 0.0
  %85 = vmatprep.subr.mxu0 0.0
  %86 = vmatpush1.msra.mxu0 0.0
  %87 = vmatprep.subr.mxu0 0.0
  %88 = vmatpush1.msra.mxu0 0.0
  %89 = vmatprep.subr.mxu0 0.0
  %90 = vmatpush1.msra.mxu0 0.0
  %91 = vmatprep.subr.mxu0 0.0
  %92 = vmatpush1.msra.mxu0 0.0
  %93 = vmatprep.subr.mxu0 0.0
  %94 = vmatpush1.msra.mxu0 0.0
  %95 = vmatprep.subr.mxu0 0.0
  %96 = vmatpush1.msra.mxu0 0.0
  %97 = vmatprep.subr.mxu0 0.0
  %98 = vmatpush1.msra.mxu0 0.0
  %99 = vmatprep.mubr.f32.mxu0 0.0
  %100 = vmatmul.mubr.f32.gmra.mrb[0].mxu0 %v33
  %v101 = vpop.f32.mrb[0].mxu0
  %v102 = vadd.f32 0.0, %v101
  %v103 = vpop.f32.mrb[0].mxu0
  %v104 = vadd.f32 0.0, %v103
  %105 = vdwg.mxu0
  %vm106 = vcmask 1041408
  %v107 = vsel %vm106, %v102, 0.0
  %v108 = vrot.slane %v107, 4
  %v109 = vadd.f32 %v107, %v108
  %v110 = vrot.slane %v109, 2
  %v111 = vadd.f32 %v109, %v110
  %v112 = vrot.slane %v111, 1
  %v113 = vadd.f32 %v111, %v112
  %v114 = vsel %vm106, %v104, 0.0
  %v115 = vrot.slane %v114, 4
  %v116 = vadd.f32 %v114, %v115
  %v117 = vrot.slane %v116, 2
  %v118 = vadd.f32 %v116, %v117
  %v119 = vrot.slane %v118, 1
  %v120 = vadd.f32 %v118, %v119
  %v123 = vcombine.low %v113, %v120
  %v125 = vunpack.c.l.s4 1966171168
  %v126 = vunpack.c.0.s8 %v125
  %v127 = vlaneseq
  %v128 = vshrl.u32 %v127, 7
  %v129 = vsub.s32 %v126, %v128
  %v130 = vrot.slane %v123, %v129
  %v132 = vunpack.c.l.s4 1966171168
  %v133 = vunpack.c.0.s8 %v132
  %v134 = vlaneseq
  %v135 = vshrl.u32 %v134, 7
  %v136 = vsub.s32 %v133, %v135
  %v137 = vrot.slane %v130, %v136
  %v139 = vlaneseq
  %vm140 = vcmp.ge.s32.totalorder %v139, 0
  %vm141 = vcmp.lt.s32.totalorder %v139, 256
  %vm142 = vmand %vm140, %vm141
  %143 = vst.msk [vmem:[#allocation2] ss:$2 sm:$0x3] %vm142, %v137
  %v144 = vmul.f32 %v102, %v102
  %v145 = vmul.f32 %v104, %v104
  %v146 = vsel %vm106, %v144, 0.0
  %v147 = vrot.slane %v146, 4
  %v148 = vadd.f32 %v146, %v147
  %v149 = vrot.slane %v148, 2
  %v150 = vadd.f32 %v148, %v149
  %v151 = vrot.slane %v150, 1
  %v152 = vadd.f32 %v150, %v151
  %v153 = vsel %vm106, %v145, 0.0
  %v154 = vrot.slane %v153, 4
  %v155 = vadd.f32 %v153, %v154
  %v156 = vrot.slane %v155, 2
  %v157 = vadd.f32 %v155, %v156
  %v158 = vrot.slane %v157, 1
  %v159 = vadd.f32 %v157, %v158
  %v162 = vcombine.low %v152, %v159
  %v164 = vunpack.c.l.s4 1966171168
  %v165 = vunpack.c.0.s8 %v164
  %v166 = vlaneseq
  %v167 = vshrl.u32 %v166, 7
  %v168 = vsub.s32 %v165, %v167
  %v169 = vrot.slane %v162, %v168
  %v171 = vunpack.c.l.s4 1966171168
  %v172 = vunpack.c.0.s8 %v171
  %v173 = vlaneseq
  %v174 = vshrl.u32 %v173, 7
  %v175 = vsub.s32 %v172, %v174
  %v176 = vrot.slane %v169, %v175
  %s178 = scalar_lea.vmem [#allocation2], 1
  %179 = vst.msk [vmem:[%s178] ss:$2 sm:$0x3] %vm142, %v176
  %v180 = vld [vmem:[#allocation2] sm:$0xf]
  %v181 = vld [vmem:[%s2] sm:$0xff]
  %v182 = vld [vmem:[%s2 + $0x8] sm:$0xff]
  %v185 = vunpack.c.l.s4 1983009808
  %v186 = vunpack.c.0.s8 %v185
  %v187 = vlaneseq
  %v188 = vshrl.u32 %v187, 7
  %v189 = vsub.s32 %v186, %v188
  %v190 = vrot.slane %v180, %v189
  %v191 = vcombine.high %v190, %v190
  %194 = vmatprep.subr.mxu0 %v182
  %195 = vmatpush1.xpose.msra.mxu0 %v181
  %196 = vmatprep.subr.mxu0 0.0
  %197 = vmatpush1.xpose.msra.mxu0 0.0
  %198 = vmatprep.subr.mxu0 0.0
  %199 = vmatpush1.xpose.msra.mxu0 0.0
  %200 = vmatprep.subr.mxu0 0.0
  %201 = vmatpush1.xpose.msra.mxu0 0.0
  %202 = vmatprep.subr.mxu0 0.0
  %203 = vmatpush1.xpose.msra.mxu0 0.0
  %204 = vmatprep.subr.mxu0 0.0
  %205 = vmatpush1.xpose.msra.mxu0 0.0
  %206 = vmatprep.subr.mxu0 0.0
  %207 = vmatpush1.xpose.msra.mxu0 0.0
  %208 = vmatprep.subr.mxu0 0.0
  %209 = vmatpush1.xpose.msra.mxu0 0.0
  %210 = vmatprep.subr.mxu0 0.0
  %211 = vmatpush1.xpose.msra.mxu0 0.0
  %212 = vmatprep.subr.mxu0 0.0
  %213 = vmatpush1.xpose.msra.mxu0 0.0
  %214 = vmatprep.subr.mxu0 0.0
  %215 = vmatpush1.xpose.msra.mxu0 0.0
  %216 = vmatprep.subr.mxu0 0.0
  %217 = vmatpush1.xpose.msra.mxu0 0.0
  %218 = vmatprep.subr.mxu0 0.0
  %219 = vmatpush1.xpose.msra.mxu0 0.0
  %220 = vmatprep.subr.mxu0 0.0
  %221 = vmatpush1.xpose.msra.mxu0 0.0
  %222 = vmatprep.subr.mxu0 0.0
  %223 = vmatpush1.xpose.msra.mxu0 0.0
  %224 = vmatprep.subr.mxu0 0.0
  %225 = vmatpush1.xpose.msra.mxu0 0.0
  %226 = vmatprep.subr.mxu0 0.0
  %227 = vmatpush1.xpose.msra.mxu0 0.0
  %228 = vmatprep.subr.mxu0 0.0
  %229 = vmatpush1.xpose.msra.mxu0 0.0
  %230 = vmatprep.subr.mxu0 0.0
  %231 = vmatpush1.xpose.msra.mxu0 0.0
  %232 = vmatprep.subr.mxu0 0.0
  %233 = vmatpush1.xpose.msra.mxu0 0.0
  %234 = vmatprep.subr.mxu0 0.0
  %235 = vmatpush1.xpose.msra.mxu0 0.0
  %236 = vmatprep.subr.mxu0 0.0
  %237 = vmatpush1.xpose.msra.mxu0 0.0
  %238 = vmatprep.subr.mxu0 0.0
  %239 = vmatpush1.xpose.msra.mxu0 0.0
  %240 = vmatprep.subr.mxu0 0.0
  %241 = vmatpush1.xpose.msra.mxu0 0.0
  %242 = vmatprep.subr.mxu0 0.0
  %243 = vmatpush1.xpose.msra.mxu0 0.0
  %244 = vmatprep.subr.mxu0 0.0
  %245 = vmatpush1.xpose.msra.mxu0 0.0
  %246 = vmatprep.subr.mxu0 0.0
  %247 = vmatpush1.xpose.msra.mxu0 0.0
  %248 = vmatprep.subr.mxu0 0.0
  %249 = vmatpush1.xpose.msra.mxu0 0.0
  %250 = vmatprep.subr.mxu0 0.0
  %251 = vmatpush1.xpose.msra.mxu0 0.0
  %252 = vmatprep.subr.mxu0 0.0
  %253 = vmatpush1.xpose.msra.mxu0 0.0
  %254 = vmatprep.subr.mxu0 0.0
  %255 = vmatpush1.xpose.msra.mxu0 0.0
  %256 = vmatprep.subr.mxu0 0.0
  %257 = vmatpush1.xpose.msra.mxu0 0.0
  %258 = vmatprep.mubr.f32.mxu0 %v191
  %259 = vmatmul.mubr.f32.gmra.mrb[0].mxu0 %v190
  %v260 = vpop.f32.mrb[0].mxu0
  %v261 = vadd.f32 0.0, %v260
  %v262 = vpop.f32.mrb[0].mxu0
  %263 = vdwg.mxu0
  %s264 = smul.f32 %s21, 0.03125
  %v265 = vstv %s264
  %v266 = vmul.f32 %v261, %v265
  %s267 = smul.f32 %s21, %s21
  %s268 = smul.f32 %s267, 0.03125
  %v269 = vstv %s268
  %v270 = vmul.f32 %v261, %v269
  %v271 = vmul.f32 %v266, %v266
  %v273 = vrot.slane %v271, 7
  %v275 = vsub.f32 %v270, %v273
  %v276 = vmax.f32 %v275, 0.0
  %v277 = vld [vmem:[%s3] sm:$0x1]
  %v278 = vadd.f32 %v276, 1e-05
  %v279 = vrsqrt.pop %v278
  %v281 = vrot.slane %v279, 1
  %v283 = vmul.f32 %v277, %v281
  %v284 = vstv %s21
  %v285 = vmul.f32 %v283, %v284
  %vm286 = vcmask 57344
  %287 = vst.msk [vmem:[#allocation3] sm:$0x1] %vm286, %v285
  %v288 = vld [vmem:[%s3 + $0x1] sm:$0x1]
  %v289 = vmul.f32 %v266, %v283
  %v290 = vsub.f32 %v288, %v289
  %291 = vst.msk [vmem:[#allocation3 + $0x1] sm:$0x1] %vm286, %v290
  %v292 = vld [vmem:[#allocation3] sm:$0x3]
  %v293 = vld [vmem:[%s2] sm:$0xff]
  %v294 = vld [vmem:[%s2 + $0x8] sm:$0xff]
  %vm295 = vcmask 64512
  %v297 = vsel %vm295, %v292, 0
  %299 = vmatprep.subr.mxu0 %v294
  %300 = vmatpush1.msra.mxu0 %v293
  %301 = vmatprep.subr.mxu0 0.0
  %302 = vmatpush1.msra.mxu0 0.0
  %303 = vmatprep.subr.mxu0 0.0
  %304 = vmatpush1.msra.mxu0 0.0
  %305 = vmatprep.subr.mxu0 0.0
  %306 = vmatpush1.msra.mxu0 0.0
  %307 = vmatprep.subr.mxu0 0.0
  %308 = vmatpush1.msra.mxu0 0.0
  %309 = vmatprep.subr.mxu0 0.0
  %310 = vmatpush1.msra.mxu0 0.0
  %311 = vmatprep.subr.mxu0 0.0
  %312 = vmatpush1.msra.mxu0 0.0
  %313 = vmatprep.subr.mxu0 0.0
  %314 = vmatpush1.msra.mxu0 0.0
  %315 = vmatprep.subr.mxu0 0.0
  %316 = vmatpush1.msra.mxu0 0.0
  %317 = vmatprep.subr.mxu0 0.0
  %318 = vmatpush1.msra.mxu0 0.0
  %319 = vmatprep.subr.mxu0 0.0
  %320 = vmatpush1.msra.mxu0 0.0
  %321 = vmatprep.subr.mxu0 0.0
  %322 = vmatpush1.msra.mxu0 0.0
  %323 = vmatprep.subr.mxu0 0.0
  %324 = vmatpush1.msra.mxu0 0.0
  %325 = vmatprep.subr.mxu0 0.0
  %326 = vmatpush1.msra.mxu0 0.0
  %327 = vmatprep.subr.mxu0 0.0
  %328 = vmatpush1.msra.mxu0 0.0
  %329 = vmatprep.subr.mxu0 0.0
  %330 = vmatpush1.msra.mxu0 0.0
  %331 = vmatprep.subr.mxu0 0.0
  %332 = vmatpush1.msra.mxu0 0.0
  %333 = vmatprep.subr.mxu0 0.0
  %334 = vmatpush1.msra.mxu0 0.0
  %335 = vmatprep.subr.mxu0 0.0
  %336 = vmatpush1.msra.mxu0 0.0
  %337 = vmatprep.subr.mxu0 0.0
  %338 = vmatpush1.msra.mxu0 0.0
  %339 = vmatprep.subr.mxu0 0.0
  %340 = vmatpush1.msra.mxu0 0.0
  %341 = vmatprep.subr.mxu0 0.0
  %342 = vmatpush1.msra.mxu0 0.0
  %343 = vmatprep.subr.mxu0 0.0
  %344 = vmatpush1.msra.mxu0 0.0
  %345 = vmatprep.subr.mxu0 0.0
  %346 = vmatpush1.msra.mxu0 0.0
  %347 = vmatprep.subr.mxu0 0.0
  %348 = vmatpush1.msra.mxu0 0.0
  %349 = vmatprep.subr.mxu0 0.0
  %350 = vmatpush1.msra.mxu0 0.0
  %351 = vmatprep.subr.mxu0 0.0
  %352 = vmatpush1.msra.mxu0 0.0
  %353 = vmatprep.subr.mxu0 0.0
  %354 = vmatpush1.msra.mxu0 0.0
  %355 = vmatprep.subr.mxu0 0.0
  %356 = vmatpush1.msra.mxu0 0.0
  %357 = vmatprep.subr.mxu0 0.0
  %358 = vmatpush1.msra.mxu0 0.0
  %359 = vmatprep.subr.mxu0 0.0
  %360 = vmatpush1.msra.mxu0 0.0
  %361 = vmatprep.subr.mxu0 0.0
  %362 = vmatpush1.msra.mxu0 0.0
  %363 = vmatprep.mubr.f32.mxu0 0.0
  %364 = vmatmul.mubr.f32.gmra.mrb[0].mxu0 %v297
  %v365 = vpop.f32.mrb[0].mxu0
  %v366 = vadd.f32 0.0, %v365
  %v367 = vpop.f32.mrb[0].mxu0
  %v368 = vadd.f32 0.0, %v367
  %369 = vdwg.mxu0
  %v370 = vlaneseq
  %v371 = vshrl.u32 %v370, 7
  %v372 = vsub.s32 0, %v371
  %v373 = vrot.slane %v366, %v372
  %v374 = vlaneseq
  %v375 = vshrl.u32 %v374, 7
  %v376 = vsub.s32 0, %v375
  %v377 = vrot.slane %v368, %v376
  %v378 = vmul.f32 %v102, %v373
  %v379 = vmul.f32 %v104, %v377
  %v380 = vlaneseq
  %v381 = vshrl.u32 %v380, 7
  %v382 = vsub.s32 1, %v381
  %v383 = vrot.slane %v366, %v382
  %v384 = vlaneseq
  %v385 = vshrl.u32 %v384, 7
  %v386 = vsub.s32 1, %v385
  %v387 = vrot.slane %v368, %v386
  %v388 = vadd.f32 %v378, %v383
  %v389 = vadd.f32 %v379, %v387
  %v390 = vxor.u32 %v389, 2147483648
  %v391 = vmul.f32 %v390, 1.442695
  %v392 = vpow.pop %v391
  %v393 = vadd.f32 %v392, 1.0
  %v394 = vrcp.pop %v393
  %v395 = vmul.f32 1.0, %v394
  %v396 = vmul.f32 %v388, %v395
  %397 = vst [vmem:[%s5] sm:$0x3] %v396
  // Predicated region
  $region22: #{init_layer_forward.1} parent=0 // pred_check
    _
  $region23: #{init_layer_forward.1} parent=0 // pred_check_branch
    %399 = sbr.rel (0) target = $region25
  $region24: #{init_layer_forward.1} parent=0 // pred_region
    _
  $region25: #{init_layer_forward.1} parent=0 // pred_fallthru
    _
  // Predicated region
  $region26: #{init_layer_forward.1} parent=0 // pred_check
    _
  $region27: #{init_layer_forward.1} parent=0 // pred_check_branch
    %401 = sbr.rel (0) target = $region29
  $region28: #{init_layer_forward.1} parent=0 // pred_region
    _
  $region29: #{init_layer_forward.1} parent=0 // pred_fallthru
    _

</llo_original>
